<compile_context>
chip_gen: v5e
topology: v5e:2x2
jax: 0.10.0
libtpu: 0.0.40
codegen_flags: <defaults>
</compile_context>

<pallas_src>
import functools

import jax
import jax.numpy as jnp
from jax import lax
from jax.experimental import pallas as pl
from jax.experimental.pallas import tpu as pltpu


# ---------------------------------------------------------------------------
# In-kernel counter-based PRNG (portable: Mosaic + interpret)
# ---------------------------------------------------------------------------
def _mix32(h):
    """murmur3 finalizer on uint32 (wrapping arithmetic)."""
    h = h ^ (h >> jnp.uint32(16))
    h = h * jnp.uint32(0x85EBCA6B)
    h = h ^ (h >> jnp.uint32(13))
    h = h * jnp.uint32(0xC2B2AE35)
    h = h ^ (h >> jnp.uint32(16))
    return h


def _keep_mask(shape, salt_u32, threshold31):
    """Boolean keep-mask with P(keep) = 1 - p (threshold31 = p * 2^31)."""
    # Unique per-element linear index inside the tile (decorrelated across tiles
    # via the per-tile salt).
    idx = lax.broadcasted_iota(jnp.int32, shape, len(shape) - 1)
    stride = shape[-1]
    for ax in range(len(shape) - 2, -1, -1):
        idx = idx + lax.broadcasted_iota(jnp.int32, shape, ax) * stride
        stride *= shape[ax]
    h = _mix32(idx.astype(jnp.uint32) ^ salt_u32)
    # Compare on 31 bits so the final compare is a plain signed int32 compare.
    return (h >> jnp.uint32(1)).astype(jnp.int32) >= jnp.int32(threshold31)


# ---------------------------------------------------------------------------
# Kernels
# ---------------------------------------------------------------------------
def _pe_add_kernel(x_ref, pe_ref, o_ref, *, lane_repeat):
    """out = x + pe (eval mode: dropout is identity)."""
    pe = pe_ref[...]
    if lane_repeat > 1:  # lane-dense 2D path: broadcast pe across the B chunks
        pe = jnp.tile(pe, (1,) * (pe.ndim - 1) + (lane_repeat,))
    o_ref[...] = (x_ref[...] + pe).astype(o_ref.dtype)


def _pe_add_dropout_kernel(seed_ref, x_ref, pe_ref, o_ref, *,
                           lane_repeat, threshold31, scale):
    """out = dropout(x + pe, p) (training mode), hash-based keep mask."""
    pe = pe_ref[...]
    if lane_repeat > 1:
        pe = jnp.tile(pe, (1,) * (pe.ndim - 1) + (lane_repeat,))
    y = x_ref[...] + pe

    # Per-tile salt: decorrelated across grid steps AND across training steps.
    salt = _mix32(seed_ref[0].astype(jnp.uint32) * jnp.uint32(0x9E3779B9)
                  + pl.program_id(0).astype(jnp.uint32) * jnp.uint32(0x85EBCA6B)
                  + jnp.uint32(1))
    keep = _keep_mask(y.shape, salt, threshold31)
    y = jnp.where(keep, y * jnp.asarray(scale, dtype=y.dtype), jnp.zeros_like(y))
    o_ref[...] = y.astype(o_ref.dtype)


# ---------------------------------------------------------------------------
# Tiling helpers
# ---------------------------------------------------------------------------
def _vmem_capacity_bytes():
    """Physical VMEM per TensorCore; falls back to 128 MiB (v5e/v6e class)."""
    try:
        return int(pltpu.get_tpu_info().vmem_capacity_bytes)
    except Exception:
        return 128 << 20


def _pick_seq_tile(S, row_bytes, budget_bytes, quantum=1):
    """Largest per-step seq tile whose double-buffered footprint fits the budget.

    Prefers an even number (>=2) of grid steps when the sequence can be split:
    >=2 steps lets the BlockSpec pipeline overlap DMA with compute, and an even
    count balances the "parallel" axis across v7x's two TensorCores (inert on
    single-core v5e/v6e).  quantum=8 when the seq axis is the block's sublane
    dim (lane-dense 2D layout) so the (8,128) rule stays satisfied.
    """
    max_ts = max(quantum, int(budget_bytes) // max(int(row_bytes), 1))
    max_ts = min(max_ts, S)
    if quantum > 1 and max_ts > quantum:
        max_ts -= max_ts % quantum
    steps = pl.cdiv(S, max_ts)
    if steps == 1 and (S > 2 * quantum or (quantum > 1 and S % quantum)):
        steps = 2
    if steps > 1 and steps % 2:
        steps += 1
    ts = pl.cdiv(S, steps)
    if quantum > 1:
        ts = pl.cdiv(ts, quantum) * quantum
    return ts


# ---------------------------------------------------------------------------
# Wrapper (module equivalent)
# ---------------------------------------------------------------------------
def init_learnable_pe(key, d_model, max_len=1024, dtype=jnp.float32):
    """nn.init.uniform_(pe, -0.02, 0.02), shape [max_len, 1, d_model]."""
    return jax.random.uniform(key, (max_len, 1, d_model), dtype=dtype,
                              minval=-0.02, maxval=0.02)


def learnable_positional_encoding(x, pe, *, dropout_p=0.1, deterministic=True,
                                  seed=0, seq_tile=None, donate_x=False):
    """x: [S, B, D], pe: [max_len, 1, D] (max_len >= S) -> [S, B, D]."""
    S, B, D = x.shape
    max_len = pe.shape[0]
    if max_len < S:
        raise ValueError("pe max_len must cover the sequence length")
    if pe.shape[1] != 1 or pe.shape[2] != D:
        raise ValueError("pe must have shape [max_len, 1, d_model]")

    # Bandwidth-bound kernel: keep pe traffic (and the add) in x's dtype.
    if pe.dtype != x.dtype:
        pe = pe.astype(x.dtype)

    itemsize = jnp.dtype(x.dtype).itemsize
    cap = _vmem_capacity_bytes()

    # Lane-dense fast path: when B is not sublane-aligned but D is lane-aligned,
    # view x/out as [S, B*D] (free contiguous reshape) so output stores are
    # unmasked full-width vst's; pe ((ts, D) tile) is lane-broadcast across B
    # in-kernel (128-aligned chunks, no extra HBM traffic).
    use_2d = (D % 128 == 0) and (B % 8 != 0) and (S >= 8)

    if use_2d:
        row_bytes = 2 * (2 * B * D + D) * itemsize       # dense: ts multiple of 8
        quantum = 8                                       # seq axis is the sublane dim
    else:
        bp = -(-B // 8) * 8                               # padded VMEM footprint of
        dp = -(-D // 128) * 128                           # (B, D) / (1, D) minor dims
        row_bytes = 2 * ((2 * bp + 8) * dp) * itemsize
        quantum = 1

    if seq_tile is None:
        ts = _pick_seq_tile(S, row_bytes, budget_bytes=cap // 2, quantum=quantum)
    else:
        ts = int(seq_tile)
        if use_2d and ts < S and ts % 8:
            raise ValueError("seq_tile must be a multiple of 8 for the lane-dense path")
    grid = (pl.cdiv(S, ts),)

    # Scoped-VMEM limit: actual double-buffered working set + 25% headroom,
    # clamped to ~3/4 of physical VMEM (96 MiB v5e/v6e, 48 MiB v7x) but never
    # below what the chosen tile needs.
    tile_bytes = ts * row_bytes
    vmem_limit = max((tile_bytes * 5) // 4, 16 << 20)
    vmem_limit = min(vmem_limit, max((cap * 3) // 4, tile_bytes + (1 << 20)))

    if use_2d:
        x_in = x.reshape(S, B * D)
        pe_in = pe.reshape(max_len, D)
        x_spec = pl.BlockSpec((ts, B * D), lambda i, *_: (i, 0))
        pe_spec = pl.BlockSpec((ts, D), lambda i, *_: (i, 0))
        out_spec = pl.BlockSpec((ts, B * D), lambda i, *_: (i, 0))
        out_shape = jax.ShapeDtypeStruct((S, B * D), x.dtype)
        lane_repeat = B
    else:
        x_in, pe_in = x, pe
        x_spec = pl.BlockSpec((ts, B, D), lambda i, *_: (i, 0, 0))
        pe_spec = pl.BlockSpec((ts, 1, D), lambda i, *_: (i, 0, 0))
        out_spec = pl.BlockSpec((ts, B, D), lambda i, *_: (i, 0, 0))
        out_shape = jax.ShapeDtypeStruct((S, B, D), x.dtype)
        lane_repeat = 1

    cparams = pltpu.CompilerParams(dimension_semantics=("parallel",),
                                   vmem_limit_bytes=int(vmem_limit))

    if deterministic or dropout_p == 0.0:
        out = pl.pallas_call(
            functools.partial(_pe_add_kernel, lane_repeat=lane_repeat),
            out_shape=out_shape,
            grid_spec=pltpu.PrefetchScalarGridSpec(
                num_scalar_prefetch=0, grid=grid,
                in_specs=[x_spec, pe_spec], out_specs=out_spec),
            compiler_params=cparams,
            input_output_aliases=({0: 0} if donate_x else {}),
        )(x_in, pe_in)
    else:
        threshold31 = min(int(round(dropout_p * (1 << 31))), (1 << 31) - 1)
        scale = 1.0 / (1.0 - dropout_p)
        seed_arr = jnp.asarray([seed], dtype=jnp.int32)
        out = pl.pallas_call(
            functools.partial(_pe_add_dropout_kernel, lane_repeat=lane_repeat,
                              threshold31=threshold31, scale=scale),
            out_shape=out_shape,
            grid_spec=pltpu.PrefetchScalarGridSpec(
                num_scalar_prefetch=1, grid=grid,
                in_specs=[x_spec, pe_spec], out_specs=out_spec),
            compiler_params=cparams,
            input_output_aliases=({1: 0} if donate_x else {}),
        )(seed_arr, x_in, pe_in)

    return out.reshape(S, B, D) if use_2d else out


# ---------------------------------------------------------------------------
# Demo / self-check
# ---------------------------------------------------------------------------
if __name__ == "__main__":
    key = jax.random.PRNGKey(0)
    k_pe, k_x, k_pe2, k_x2 = jax.random.split(key, 4)

    # --- small 3D-path shapes ------------------------------------------------
    seq_len, batch, d_model, max_len = 8, 2, 32, 64
    pe = init_learnable_pe(k_pe, d_model, max_len=max_len)
    x = jax.random.normal(k_x, (seq_len, batch, d_model), dtype=jnp.float32)
    ref = x + pe[:seq_len]

    # Eval mode (dropout = identity): deterministic, checkable.
    out = jax.block_until_ready(
        learnable_positional_encoding(x, pe, dropout_p=0.1, deterministic=True))
    assert out.shape == (seq_len, batch, d_model) and out.dtype == x.dtype
    assert jnp.allclose(out, ref, atol=1e-6), "eval mismatch vs reference"

    # Ragged sequence (S=7 does not divide the auto tile): cdiv grid path.
    out7 = jax.block_until_ready(
        learnable_positional_encoding(x[:7], pe, deterministic=True))
    assert jnp.allclose(out7, ref[:7], atol=1e-6), "ragged-grid mismatch"

    # Training mode: every element is either 0 (dropped) or (x+pe)/(1-p).
    p = 0.1
    out_tr = jax.block_until_ready(
        learnable_positional_encoding(x, pe, dropout_p=p, deterministic=False, seed=42))
    assert out_tr.shape == (seq_len, batch, d_model)
    expected = ref / (1.0 - p)
    is_zero = jnp.abs(out_tr) <= 1e-6
    is_kept = jnp.abs(out_tr - expected) <= 1e-4 * (1.0 + jnp.abs(expected))
    assert bool(jnp.all(is_zero | is_kept)), "dropout scaling mismatch"
    drop_frac = float(jnp.mean(is_zero.astype(jnp.float32)))
    assert 0.0 < drop_frac < 0.5, f"implausible drop fraction {drop_frac}"

    # --- lane-dense 2D fast path (B not sublane-aligned, D lane-aligned) -----
    s2, b2, d2, ml2 = 16, 2, 128, 32
    pe2 = init_learnable_pe(k_pe2, d2, max_len=ml2)
    x2 = jax.random.normal(k_x2, (s2, b2, d2), dtype=jnp.float32)
    ref2 = x2 + pe2[:s2]
    out2 = jax.block_until_ready(
        learnable_positional_encoding(x2, pe2, deterministic=True))
    assert out2.shape == (s2, b2, d2)
    assert jnp.allclose(out2, ref2, atol=1e-6), "lane-dense path mismatch"
    out2_tr = jax.block_until_ready(
        learnable_positional_encoding(x2, pe2, dropout_p=p, deterministic=False, seed=7))
    exp2 = ref2 / (1.0 - p)
    ok2 = (jnp.abs(out2_tr) <= 1e-6) | (jnp.abs(out2_tr - exp2) <= 1e-4 * (1.0 + jnp.abs(exp2)))
    assert bool(jnp.all(ok2)), "lane-dense dropout mismatch"

    print("KERNEL_OK")
</pallas_src>

<mosaic_0001>
module attributes {stable_mosaic.version = 11 : i64} {
  func.func @_pe_add_kernel(%arg0: i32, %arg1: memref<4x2x32xf32, #tpu.memory_space<vmem>>, %arg2: memref<4x1x32xf32, #tpu.memory_space<vmem>>, %arg3: memref<4x2x32xf32, #tpu.memory_space<vmem>>) attributes {dimension_semantics = [#tpu.dimension_semantics<parallel>], iteration_bounds = array<i64: 2>, scalar_prefetch = 0 : i64, scratch_operands = 0 : i64, tpu.core_type = #tpu.core_type<tc>, window_params = [{transform_indices = @transform_0, window_bounds = array<i64: 4, 2, 32>}, {transform_indices = @transform_1, window_bounds = array<i64: 4, 1, 32>}, {transform_indices = @transform_2, window_bounds = array<i64: 4, 2, 32>}]} {
    %c0 = arith.constant 0 : index
    %c0_0 = arith.constant 0 : index
    %c0_1 = arith.constant 0 : index
    %0 = vector.load %arg2[%c0, %c0_0, %c0_1] : memref<4x1x32xf32, #tpu.memory_space<vmem>>, vector<4x1x32xf32>
    %c0_2 = arith.constant 0 : index
    %c0_3 = arith.constant 0 : index
    %c0_4 = arith.constant 0 : index
    %1 = vector.load %arg1[%c0_2, %c0_3, %c0_4] : memref<4x2x32xf32, #tpu.memory_space<vmem>>, vector<4x2x32xf32>
    %2 = vector.broadcast %0 : vector<4x1x32xf32> to vector<4x2x32xf32>
    %3 = arith.addf %1, %2 : vector<4x2x32xf32>
    %c0_5 = arith.constant 0 : index
    %c0_6 = arith.constant 0 : index
    %c0_7 = arith.constant 0 : index
    %4 = vector.load %arg3[%c0_5, %c0_6, %c0_7] : memref<4x2x32xf32, #tpu.memory_space<vmem>>, vector<4x2x32xf32>
    tpu.vector_store %arg3[%c0_5, %c0_6, %c0_7], %3 {strides = array<i32>} : memref<4x2x32xf32, #tpu.memory_space<vmem>>, vector<4x2x32xf32>,
    return
  }
  func.func @transform_0(%arg0: i32) -> (i32, i32, i32) {
    %c0_i32 = arith.constant 0 : i32
    %c0_i32_0 = arith.constant 0 : i32
    %c0_i32_1 = arith.constant 0 : i32
    return %arg0, %c0_i32, %c0_i32_0 : i32, i32, i32
  }
  func.func @transform_1(%arg0: i32) -> (i32, i32, i32) {
    %c0_i32 = arith.constant 0 : i32
    %c0_i32_0 = arith.constant 0 : i32
    %c0_i32_1 = arith.constant 0 : i32
    return %arg0, %c0_i32, %c0_i32_0 : i32, i32, i32
  }
  func.func @transform_2(%arg0: i32) -> (i32, i32, i32) {
    %c0_i32 = arith.constant 0 : i32
    %c0_i32_0 = arith.constant 0 : i32
    %c0_i32_1 = arith.constant 0 : i32
    return %arg0, %c0_i32, %c0_i32_0 : i32, i32, i32
  }
}

</mosaic_0001>

<llo_original>
// kernel: tpu_custom_call.1
$region0: #{tpu_custom_call.1}
  #allocation0 [shape = 'u32[]', space=smem, size = 0x4, offset = 0x4, fixed_abs, tag = 'smem constant byte address 0x4 - core index']
  #allocation1 [shape = 'u32[72,128]{1,0:T(1,128)}', space=vmem, size = 0x9000, scoped, tag = 'internal scratch']
  %s0 = inlined_call_operand.vmem [shape: f32[8,2,32], index: 0, kind: input, shape index: {}]
  %s1 = inlined_call_operand.vmem [shape: f32[64,1,32], index: 1, kind: input, shape index: {}]
  %s2 = inlined_call_operand.hbm [shape: f32[8,2,32], index: 2, kind: output, shape index: {}]
  %s3 = sld [smem:[#allocation0]]
  $region41: #{tpu_custom_call.1} parent=0
    _
  %s5 = ssub.s32 1, %s3
  %s6 = scalar_select 0, %s5, %s3
  $region1: #{tpu_custom_call.1} parent=0
    #allocation2 [shape = 'u8[8192]{0}', space=vmem, size = 0x2000, scoped, tag = 'output window, operand 0']
    #allocation3 [shape = 's32[2]{0}', space=sflag, size = 0x8, scoped, tag = 'scoped memory for tpu_custom_call.1']
    %7 = vsyncpa [#allocation3], 0
    %s8 = scalar_lea.sflag [#allocation3], 1
    %9 = vsyncpa %s8, 0
    loop: start=0, step=1, limit=4
    $region2: #{tpu_custom_call.1} parent=1 // loop_pre_header
      _
    $region3: #{tpu_custom_call.1} parent=1 // loop_header
      %s11 = sphi 0, %s15
      %p12 = scmp.ge.s32.totalorder %s11, 4
      %s21 = sphi 0, %s23
      %s24 = sphi 0, %s21
      %s25 = sphi 0, %s24
      %s41 = sphi 0, %s25
      %s47 = sphi 0, %s49
      %s50 = sphi 0, %s47
      %s51 = sphi 0, %s50
      %s67 = sphi 0, %s51
      %s73 = sphi 0, %s75
      %s76 = sphi 0, %s73
      %s77 = sphi 0, %s76
      %s93 = sphi 0, %s77
    $region4: #{tpu_custom_call.1} parent=1 // loop_header_branch
      %14 = sbr.rel (%p12) target = $region8
    $region5: #{tpu_custom_call.1} parent=1 // loop_body
      %s16 = ssub.s32 %s11, 1
      %s17 = ssub.s32 %s11, 2
      %s18 = sadd.s32 %s11, 1
      %s19 = ssub.s32 %s11, %s18
      %p20 = scmp.eq.s32.totalorder %s19, 0
      %s22 = sadd.s32 %s21, 1
      %s23 = scalar_select %p20, %s21, %s22
      %p26 = pneg %p20
      %p27 = scmp.eq.s32.totalorder %s11, 1
      %p28 = por %p26, %p27
      %p29 = scmp.ne.s32.totalorder %s21, %s24
      %p30 = scmp.eq.s32.totalorder %s11, 0
      %p31 = por %p29, %p30
      %p32 = scmp.ne.s32.totalorder %s21, %s24
      %p33 = scmp.eq.s32.totalorder %s16, 1
      %p34 = por %p32, %p33
      %p35 = scmp.ne.s32.totalorder %s24, %s25
      %p36 = scmp.eq.s32.totalorder %s16, 0
      %p37 = por %p35, %p36
      %p38 = scmp.ne.s32.totalorder %s24, %s25
      %p39 = scmp.eq.s32.totalorder %s17, 1
      %p40 = por %p38, %p39
      %p42 = scmp.ne.s32.totalorder %s25, %s41
      %p43 = scmp.eq.s32.totalorder %s17, 0
      %p44 = por %p42, %p43
      %s45 = ssub.s32 %s11, %s18
      %p46 = scmp.eq.s32.totalorder %s45, 0
      %s48 = sadd.s32 %s47, 1
      %s49 = scalar_select %p46, %s47, %s48
      %p52 = pneg %p46
      %p53 = scmp.eq.s32.totalorder %s11, 1
      %p54 = por %p52, %p53
      %p55 = scmp.ne.s32.totalorder %s47, %s50
      %p56 = scmp.eq.s32.totalorder %s11, 0
      %p57 = por %p55, %p56
      %p58 = scmp.ne.s32.totalorder %s47, %s50
      %p59 = scmp.eq.s32.totalorder %s16, 1
      %p60 = por %p58, %p59
      %p61 = scmp.ne.s32.totalorder %s50, %s51
      %p62 = scmp.eq.s32.totalorder %s16, 0
      %p63 = por %p61, %p62
      %p64 = scmp.ne.s32.totalorder %s50, %s51
      %p65 = scmp.eq.s32.totalorder %s17, 1
      %p66 = por %p64, %p65
      %p68 = scmp.ne.s32.totalorder %s51, %s67
      %p69 = scmp.eq.s32.totalorder %s17, 0
      %p70 = por %p68, %p69
      %s71 = ssub.s32 %s11, %s18
      %p72 = scmp.eq.s32.totalorder %s71, 0
      %s74 = sadd.s32 %s73, 1
      %s75 = scalar_select %p72, %s73, %s74
      %p78 = pneg %p72
      %p79 = scmp.eq.s32.totalorder %s11, 1
      %p80 = por %p78, %p79
      %p81 = scmp.ne.s32.totalorder %s73, %s76
      %p82 = scmp.eq.s32.totalorder %s11, 0
      %p83 = por %p81, %p82
      %p84 = scmp.ne.s32.totalorder %s73, %s76
      %p85 = scmp.eq.s32.totalorder %s16, 1
      %p86 = por %p84, %p85
      %p87 = scmp.ne.s32.totalorder %s76, %s77
      %p88 = scmp.eq.s32.totalorder %s16, 0
      %p89 = por %p87, %p88
      %p90 = scmp.ne.s32.totalorder %s76, %s77
      %p91 = scmp.eq.s32.totalorder %s17, 1
      %p92 = por %p90, %p91
      %p94 = scmp.ne.s32.totalorder %s77, %s93
      %p95 = scmp.eq.s32.totalorder %s17, 0
      %p96 = por %p94, %p95
      %p97 = scmp.le.s32.totalorder 1, %s11
      %p98 = scmp.lt.s32.totalorder %s11, 3
      %p99 = pnand %p97, %p98
      %p100 = pneg %p99
      // Predicated region
      $region9: #{tpu_custom_call.1} parent=5 // pred_check
        _
      $region10: #{tpu_custom_call.1} parent=5 // pred_check_branch
        %102 = sbr.rel (%p99) target = $region12
      $region11: #{tpu_custom_call.1} parent=5 // pred_region
        %s103 = ssub.s32 %s11, 1
      $region12: #{tpu_custom_call.1} parent=5 // pred_fallthru
        _
      %p104 = scmp.lt.s32.totalorder %s11, 2
      // Predicated region
      $region13: #{tpu_custom_call.1} parent=5 // pred_check
        %p105 = pneg %p104
      $region14: #{tpu_custom_call.1} parent=5 // pred_check_branch
        %107 = sbr.rel (%p105) target = $region16
      $region15: #{tpu_custom_call.1} parent=5 // pred_region
        // Predicated region
        $region17: #{tpu_custom_call.1} parent=15 // pred_check
          %p108 = pneg %p31
        $region18: #{tpu_custom_call.1} parent=15 // pred_check_branch
          %110 = sbr.rel (%p108) target = $region20
        $region19: #{tpu_custom_call.1} parent=15 // pred_region
          %s111 = smul.u32 4, %s11
          %p112 = scmp.lt.s32.totalorder %s111, 7
          %s113 = scalar_select %p112, %s111, 7
          %s114 = smul.addr %s113, 2
          %s115 = scalar_lea.vmem %s0, %s114
          %s116 = smul.u32 4, %s11
        $region20: #{tpu_custom_call.1} parent=15 // pred_fallthru
          _
        // Predicated region
        $region21: #{tpu_custom_call.1} parent=15 // pred_check
          %p117 = pneg %p57
        $region22: #{tpu_custom_call.1} parent=15 // pred_check_branch
          %119 = sbr.rel (%p117) target = $region24
        $region23: #{tpu_custom_call.1} parent=15 // pred_region
          %s120 = smul.u32 4, %s11
          %p121 = scmp.lt.s32.totalorder %s120, 63
          %s122 = scalar_select %p121, %s120, 63
          %s123 = scalar_lea.vmem %s1, %s122
          %s124 = smul.u32 4, %s11
        $region24: #{tpu_custom_call.1} parent=15 // pred_fallthru
          _
      $region16: #{tpu_custom_call.1} parent=5 // pred_fallthru
        _
      %p125 = scmp.le.s32.totalorder 1, %s11
      %p126 = scmp.lt.s32.totalorder %s11, 3
      %p127 = pnand %p125, %p126
      %p128 = pneg %p127
      // Predicated region
      $region25: #{tpu_custom_call.1} parent=5 // pred_check
        _
      $region26: #{tpu_custom_call.1} parent=5 // pred_check_branch
        %130 = sbr.rel (%p127) target = $region28
      $region27: #{tpu_custom_call.1} parent=5 // pred_region
        %s131 = ssub.s32 %s11, 1
        %s132 = smul.u32 4, %s16
        %p133 = scmp.lt.s32.totalorder %s132, 7
        %s134 = scalar_select %p133, %s132, 7
        %s135 = smul.addr %s134, 2
        %s136 = scalar_lea.vmem %s0, %s135
        %p137 = pneg %p37
        %p138 = pneg %p34
        %s139 = smul.u32 4, %s16
        %p140 = scmp.lt.s32.totalorder %s139, 63
        %s141 = scalar_select %p140, %s139, 63
        %s142 = scalar_lea.vmem %s1, %s141
        %p143 = pneg %p63
        %p144 = pneg %p60
        %p145 = pneg %p89
        %p146 = pneg %p86
        %s147 = sand.u32 %s76, 1
        %s148 = scalar_lea.sflag [#allocation3], %s147
        %s149 = sand.u32 %s76, 1
        %s150 = smul.addr %s149, 8
        %s151 = scalar_lea.vmem [#allocation2], %s150
        %s152 = smul.u32 4, %s16
        %p153 = scmp.lt.s32.totalorder %s152, 7
        %s154 = scalar_select %p153, %s152, 7
        %s155 = smul.addr %s154, 2
        %s156 = scalar_lea.vmem %s0, %s155
        %s157 = smul.u32 4, %s16
        %s158 = smul.u32 4, %s16
        %p159 = scmp.lt.s32.totalorder %s158, 63
        %s160 = scalar_select %p159, %s158, 63
        %s161 = scalar_lea.vmem %s1, %s160
        %s162 = smul.u32 4, %s16
        %s163 = smul.u32 4, %s16
        %v164 = vld [vmem:[%s161] sm:$0x1]
        %v165 = vld [vmem:[%s161 + $0x1] sm:$0x1]
        %v166 = vld [vmem:[%s161 + $0x2] sm:$0x1]
        %v167 = vld [vmem:[%s161 + $0x3] sm:$0x1]
        %v168 = vld [vmem:[%s156] sm:$0x3]
        %v169 = vld [vmem:[%s156 + $0x2] sm:$0x3]
        %v170 = vld [vmem:[%s156 + $0x4] sm:$0x3]
        %v171 = vld [vmem:[%s156 + $0x6] sm:$0x3]
        %v176 = vperm.slane %v164, 0
        %v177 = vperm.slane %v165, 0
        %v178 = vperm.slane %v166, 0
        %v179 = vperm.slane %v167, 0
        %v184 = vadd.f32 %v168, %v176
        %v185 = vadd.f32 %v169, %v177
        %v186 = vadd.f32 %v170, %v178
        %v187 = vadd.f32 %v171, %v179
        %vm188 = vcmask 254976
        %189 = vst.msk [vmem:[%s151] sm:$0x3] %vm188, %v184
        %190 = vst.msk [vmem:[%s151 + $0x2] sm:$0x3] %vm188, %v185
        %191 = vst.msk [vmem:[%s151 + $0x4] sm:$0x3] %vm188, %v186
        %192 = vst.msk [vmem:[%s151 + $0x6] sm:$0x3] %vm188, %v187
        %s193 = sand.u32 %s76, 1
        %s194 = scalar_lea.sflag [#allocation3], %s193
        %s195 = sand.u32 %s76, 1
        %s196 = smul.addr %s195, 8
        %s197 = scalar_lea.vmem [#allocation2], %s196
        // Predicated region
        $region29: #{tpu_custom_call.1} parent=27 // pred_check
          %p198 = pneg %p86
        $region30: #{tpu_custom_call.1} parent=27 // pred_check_branch
          %200 = sbr.rel (%p198) target = $region32
        $region31: #{tpu_custom_call.1} parent=27 // pred_region
          %s201 = smul.u32 4, %s16
          %203 = vsyncadd %s194, 0
          %s204 = smul.addr %s201, 2
          %s205 = scalar_lea.hbm %s2, %s204
          %s206 = sshll.u32 %s197, 4
          %s207 = int_to_ptr.vmem [resolvable:$true] %s206
          %s208 = sshll.u32 %s205, 4
          %s209 = int_to_ptr.hbm [resolvable:$true] %s208
          %214 = dma.vmem_to_hbm [thread:$0]  %s207, 128, %s209, %s194, 32, 32, 2
        $region32: #{tpu_custom_call.1} parent=27 // pred_fallthru
          _
      $region28: #{tpu_custom_call.1} parent=5 // pred_fallthru
        _
      %p215 = scmp.le.s32.totalorder 2, %s11
      // Predicated region
      $region33: #{tpu_custom_call.1} parent=5 // pred_check
        %p216 = pneg %p215
      $region34: #{tpu_custom_call.1} parent=5 // pred_check_branch
        %218 = sbr.rel (%p216) target = $region36
      $region35: #{tpu_custom_call.1} parent=5 // pred_region
        %s219 = ssub.s32 %s11, 2
        // Predicated region
        $region37: #{tpu_custom_call.1} parent=35 // pred_check
          %p220 = pneg %p92
        $region38: #{tpu_custom_call.1} parent=35 // pred_check_branch
          %222 = sbr.rel (%p220) target = $region40
        $region39: #{tpu_custom_call.1} parent=35 // pred_region
          %s223 = sand.u32 %s77, 1
          %s224 = scalar_lea.sflag [#allocation3], %s223
          %s225 = sand.u32 %s77, 1
          %s226 = smul.addr %s225, 8
          %s227 = scalar_lea.vmem [#allocation2], %s226
          %229 = dma.done %s224, 128
        $region40: #{tpu_custom_call.1} parent=35 // pred_fallthru
          _
      $region36: #{tpu_custom_call.1} parent=5 // pred_fallthru
        _
    $region6: #{tpu_custom_call.1} parent=1 // loop_footer
      %s15 = sadd.s32 1, %s11
    $region7: #{tpu_custom_call.1} parent=1 // loop_footer_branch
      %10 = sbr.rel target = $region3
    $region8: #{tpu_custom_call.1} parent=1 // loop_exit
      _
    %230 = vsyncpa [#allocation3], 1
    %s231 = scalar_lea.sflag [#allocation3], 1
    %232 = vsyncpa %s231, 1

</llo_original>
